<compile_context>
chip_gen: v6e
topology: v6e:2x2x1
jax: 0.10.0
libtpu: 0.0.40
codegen_flags: <defaults>
</compile_context>

<pallas_src>
import jax
import jax.numpy as jnp
from jax import lax
from jax.experimental import pallas as pl
from jax.experimental.pallas import tpu as pltpu


def _round_up(x, m):
    return -(-x // m) * m


# ---------------------------------------------------------------------------
# Path A: small vocab -> token table resident in VMEM, gather via one-hot MXU.
# ---------------------------------------------------------------------------
def _table_kernel(idx_ref, tok_ref, pos_ref, o_ref):
    # idx_ref : (tq, B) int32  token ids of this block (one column per batch)
    # tok_ref : (V, E)         full token table (constant block -> fetched once)
    # pos_ref : (tq, E)        positional rows of this block
    # o_ref   : (B, tq, E)     output block
    tq, B = idx_ref.shape
    V = tok_ref.shape[0]
    ids = idx_ref[...]
    tbl = tok_ref[...]
    pos = pos_ref[...].astype(jnp.float32)
    # Hoisted out of the batch loop (JAX does not CSE broadcast_in_dim).
    iota_v = lax.broadcasted_iota(jnp.int32, (tq, V), 1)
    for b in range(B):                                   # static unroll over batch
        onehot = (ids[:, b:b + 1] == iota_v).astype(tbl.dtype)
        g = jnp.dot(onehot, tbl, preferred_element_type=jnp.float32)
        o_ref[b, :, :] = (g + pos).astype(o_ref.dtype)


# ---------------------------------------------------------------------------
# Path B: large vocab -> HBM row gather, double-buffered across grid steps.
# ---------------------------------------------------------------------------
def _gather_kernel(idx_ref, tok_hbm, pos_ref, o_ref, gbuf, sem):
    # idx_ref : (n_tb*B*tq,) int32 in SMEM (scalar prefetch), laid out [tb, b, t]
    # tok_hbm : (V, E) token table left in HBM (pl.ANY) -> manual DMA row gather
    # pos_ref : (tq, E) positional rows of this block (auto-pipelined)
    # o_ref   : (B, tq, E) output block
    # gbuf    : (2, B*tq, E) double-buffered VMEM gather scratch
    # sem     : (2,) DMA semaphores, one per slot
    tb = pl.program_id(0)
    n_tb = pl.num_programs(0)
    B = o_ref.shape[0]
    tq = pos_ref.shape[0]
    rows = B * tq
    slot = tb % 2

    def issue_block(blk, dst_slot):
        base = blk * rows

        def body(i, carry):
            tok_id = idx_ref[base + i]
            pltpu.make_async_copy(
                tok_hbm.at[pl.ds(tok_id, 1)],
                gbuf.at[dst_slot, pl.ds(i, 1)],
                sem.at[dst_slot],
            ).start()
            return carry

        # Unrolled issue loop: packs SMEM id reads + descriptor pushes.
        lax.fori_loop(0, rows, body, 0, unroll=8)

    # Prime the pipeline. Requires sequential grid walk -> "arbitrary" semantics.
    @pl.when(tb == 0)
    def _():
        issue_block(0, 0)

    # Prefetch the next block's rows into the other slot while this block is
    # waited on / added / stored (cross-step double buffering).
    @pl.when(tb + 1 < n_tb)
    def _():
        issue_block(tb + 1, 1 - slot)

    # Single wait for the whole gathered block: every row copy signals sem[slot]
    # with E*itemsize bytes; this (rows, E)-shaped descriptor waits for exactly
    # rows*E*itemsize bytes.  src==dst here is only used for its byte count.
    pltpu.make_async_copy(gbuf.at[slot], gbuf.at[slot], sem.at[slot]).wait()

    pos = pos_ref[...]
    for b in range(B):                                   # static unroll; lane-dense stores
        o_ref[b, :, :] = (gbuf[slot, pl.ds(b * tq, tq), :] + pos).astype(o_ref.dtype)


# ---------------------------------------------------------------------------
# Wrapper
# ---------------------------------------------------------------------------
def embedding_stem(idx, token_table, pos_table, *, gather_from_hbm=None,
                   vmem_budget_bytes=None):
    """Computes token_table[idx] + pos_table[:T] (EmbeddingStem.forward)."""
    B, T = idx.shape
    V, E = token_table.shape
    L, E2 = pos_table.shape
    assert E == E2, "embed_dim mismatch between tables"
    assert T <= L, "sequence length exceeds max_len"

    out_dtype = jnp.result_type(token_table.dtype, pos_table.dtype)
    isz = jnp.dtype(token_table.dtype).itemsize

    # --- per-generation VMEM budget (v7x: 64 MiB/TC, v5e/v6e: 128 MiB) --------
    cap = 64 * 1024 * 1024
    try:
        cap = int(getattr(pltpu.get_tpu_info(), "vmem_capacity_bytes", cap))
    except Exception:
        pass
    if vmem_budget_bytes is None:
        vmem_budget_bytes = int(cap * 0.55)
    budget = int(vmem_budget_bytes)
    vmem_limit = int(min(max(budget + (8 << 20), 32 << 20),
                         max(cap - (4 << 20), 32 << 20)))

    t8 = _round_up(T, 8)

    # --- choose gather strategy ------------------------------------------------
    table_bytes = V * E * isz
    use_table = (table_bytes <= 8 * 1024 * 1024 and V <= 4096
                 and 2 * table_bytes <= budget // 2)
    if gather_from_hbm is True:
        use_table = False
    elif gather_from_hbm is False:
        use_table = True

    if use_table:
        # per-token block cost: pos (x2 bufs) + out (x2 bufs per batch) + one-hot temp
        per_tok = 2 * (B + 1) * E * isz + V * (isz + 4) + 8 * B
        cap_tq = (budget - 2 * table_bytes) // per_tok
        if cap_tq < 8:
            use_table = False                       # table + blocks don't fit; fall back

    if use_table:
        tq = min(t8, (cap_tq // 8) * 8)
    else:
        # per-token block cost: gather scratch (2 slots x B) + pos (x2) + out (x2 x B)
        per_tok = (4 * B + 2) * E * isz + 8 * B
        cap_tq = max(8, budget // per_tok)
        tq = max(8, min(t8, (cap_tq // 8) * 8))
        # Bound in-flight row DMAs per block.
        tq = min(tq, max(8, ((4096 // max(B, 1)) // 8) * 8))

    n_tb = _round_up(T, tq) // tq
    t_pad = n_tb * tq

    # Positional rows are indexed in place by BlockSpec (no wrapper copy) unless
    # padding spills past max_len.
    pos_in = pos_table if t_pad <= L else jnp.pad(pos_table, ((0, t_pad - L), (0, 0)))

    # Token ids: clip guards OOB gathers; pad T -> t_pad.
    idx_i32 = jnp.clip(idx.astype(jnp.int32), 0, V - 1)
    if t_pad != T:
        idx_i32 = jnp.pad(idx_i32, ((0, 0), (0, t_pad - T)))

    if use_table:
        idx_tb = idx_i32.T                               # (t_pad, B): tokens on sublanes
        grid_spec = pltpu.PrefetchScalarGridSpec(
            num_scalar_prefetch=0,
            grid=(n_tb,),
            in_specs=[
                pl.BlockSpec((tq, B), lambda tb: (tb, 0)),     # ids for this block
                pl.BlockSpec((V, E), lambda tb: (0, 0)),       # whole table, fetched once
                pl.BlockSpec((tq, E), lambda tb: (tb, 0)),     # pos rows
            ],
            out_specs=pl.BlockSpec((B, tq, E), lambda tb: (0, tb, 0)),
        )
        out = pl.pallas_call(
            _table_kernel,
            out_shape=jax.ShapeDtypeStruct((B, t_pad, E), out_dtype),
            grid_spec=grid_spec,
            compiler_params=pltpu.CompilerParams(
                dimension_semantics=("parallel",),
                vmem_limit_bytes=vmem_limit,
            ),
        )(idx_tb, token_table, pos_in)
    else:
        # [tb, b, t]-contiguous flat ids for SMEM scalar prefetch.
        idx_flat = idx_i32.reshape(B, n_tb, tq).transpose(1, 0, 2).reshape(-1)
        grid_spec = pltpu.PrefetchScalarGridSpec(
            num_scalar_prefetch=1,                               # idx_flat -> SMEM
            grid=(n_tb,),
            in_specs=[
                pl.BlockSpec(memory_space=pl.ANY),                    # token table (HBM)
                pl.BlockSpec((tq, E), lambda tb, idx_ref: (tb, 0)),   # pos rows
            ],
            out_specs=pl.BlockSpec((B, tq, E), lambda tb, idx_ref: (0, tb, 0)),
            scratch_shapes=[
                pltpu.VMEM((2, B * tq, E), token_table.dtype),        # double-buffered gather
                pltpu.SemaphoreType.DMA((2,)),                        # one sem per slot
            ],
        )
        out = pl.pallas_call(
            _gather_kernel,
            out_shape=jax.ShapeDtypeStruct((B, t_pad, E), out_dtype),
            grid_spec=grid_spec,
            compiler_params=pltpu.CompilerParams(
                # "arbitrary": cross-step double buffering primes at tb == 0 and
                # relies on the grid being walked sequentially on one core.
                dimension_semantics=("arbitrary",),
                vmem_limit_bytes=vmem_limit,
            ),
        )(idx_flat, token_table, pos_in)

    return out[:, :T, :] if t_pad != T else out


if __name__ == "__main__":
    # Small shapes consistent with the module's forward.
    vocab_size, embed_dim, max_len = 64, 128, 16
    B, T = 2, 8

    key = jax.random.PRNGKey(0)
    k_tok, k_pos, k_idx = jax.random.split(key, 3)

    # Deterministic "parameters" (nn.Embedding default init is N(0, 1)).
    token_table = jax.random.normal(k_tok, (vocab_size, embed_dim), jnp.float32)
    pos_table = jax.random.normal(k_pos, (max_len, embed_dim), jnp.float32)
    idx = jax.random.randint(k_idx, (B, T), 0, vocab_size, dtype=jnp.int32)

    # Pure-JAX reference of the PyTorch forward.
    ref = token_table[idx] + pos_table[:T][None, :, :]

    # Default (small-vocab) path: VMEM-resident table + one-hot MXU gather.
    out = jax.block_until_ready(embedding_stem(idx, token_table, pos_table))
    assert out.shape == (B, T, embed_dim)
    assert out.dtype == jnp.float32
    assert jnp.allclose(out, ref, atol=1e-4), "mismatch vs reference (table path)"

    # Force the HBM-gather (large-vocab) path to exercise the DMA kernel too.
    out_g = jax.block_until_ready(
        embedding_stem(idx, token_table, pos_table, gather_from_hbm=True))
    assert jnp.allclose(out_g, ref, atol=1e-6), "mismatch vs reference (gather path)"

    # Ragged case: T not a multiple of 8, exercising the padding path.
    T2 = 5
    idx2 = jax.random.randint(
        jax.random.PRNGKey(1), (B, T2), 0, vocab_size, dtype=jnp.int32)
    ref2 = token_table[idx2] + pos_table[:T2][None, :, :]
    out2 = jax.block_until_ready(embedding_stem(idx2, token_table, pos_table))
    assert out2.shape == (B, T2, embed_dim)
    assert jnp.allclose(out2, ref2, atol=1e-4), "mismatch vs reference (ragged, table)"
    out2g = jax.block_until_ready(
        embedding_stem(idx2, token_table, pos_table, gather_from_hbm=True))
    assert jnp.allclose(out2g, ref2, atol=1e-6), "mismatch vs reference (ragged, gather)"

    print("KERNEL_OK")
</pallas_src>

<mosaic_0001>
module attributes {stable_mosaic.version = 11 : i64} {
  func.func @_table_kernel(%arg0: i32, %arg1: memref<8x2xi32, #tpu.memory_space<vmem>>, %arg2: memref<64x128xf32, #tpu.memory_space<vmem>>, %arg3: memref<8x128xf32, #tpu.memory_space<vmem>>, %arg4: memref<2x8x128xf32, #tpu.memory_space<vmem>>) attributes {dimension_semantics = [#tpu.dimension_semantics<parallel>], iteration_bounds = array<i64: 1>, scalar_prefetch = 0 : i64, scratch_operands = 0 : i64, tpu.core_type = #tpu.core_type<tc>, window_params = [{transform_indices = @transform_0, window_bounds = array<i64: 8, 2>}, {pipeline_mode = #tpu.pipeline_mode<synchronous>, transform_indices = @transform_1, window_bounds = array<i64: 64, 128>}, {transform_indices = @transform_2, window_bounds = array<i64: 8, 128>}, {transform_indices = @transform_3, window_bounds = array<i64: 2, 8, 128>}]} {
    %c0 = arith.constant 0 : index
    %c0_0 = arith.constant 0 : index
    %0 = vector.load %arg1[%c0, %c0_0] : memref<8x2xi32, #tpu.memory_space<vmem>>, vector<8x2xi32>
    %c0_1 = arith.constant 0 : index
    %c0_2 = arith.constant 0 : index
    %1 = vector.load %arg2[%c0_1, %c0_2] : memref<64x128xf32, #tpu.memory_space<vmem>>, vector<64x128xf32>
    %c0_3 = arith.constant 0 : index
    %c0_4 = arith.constant 0 : index
    %2 = vector.load %arg3[%c0_3, %c0_4] : memref<8x128xf32, #tpu.memory_space<vmem>>, vector<8x128xf32>
    %3 = tpu.iota {dimensions = array<i32: 1>} : vector<8x64xi32>
    %4 = vector.extract_strided_slice %0 {offsets = [0, 0], sizes = [8, 1], strides = [1, 1]} : vector<8x2xi32> to vector<8x1xi32>
    %5 = vector.broadcast %4 : vector<8x1xi32> to vector<8x64xi32>
    %6 = arith.cmpi eq, %5, %3 : vector<8x64xi32>
    %7 = arith.extui %6 : vector<8x64xi1> to vector<8x64xi32>
    %8 = arith.sitofp %7 : vector<8x64xi32> to vector<8x64xf32>
    %cst = arith.constant dense<0.000000e+00> : vector<8x128xf32>
    %9 = tpu.matmul %8, %1, %cst {dimension_numbers = #tpu.dot_dimension_numbers<[1], [0], [0], [1], [0, 0, 1, 1], [], []>} : vector<8x64xf32>, vector<64x128xf32>, vector<8x128xf32> -> vector<8x128xf32>
    %10 = arith.addf %9, %2 : vector<8x128xf32>
    %c0_5 = arith.constant 0 : index
    %c0_6 = arith.constant 0 : index
    %c0_7 = arith.constant 0 : index
    %11 = vector.load %arg4[%c0_5, %c0_6, %c0_7] : memref<2x8x128xf32, #tpu.memory_space<vmem>>, vector<1x8x128xf32>
    %12 = vector.shape_cast %11 : vector<1x8x128xf32> to vector<8x128xf32>
    %13 = vector.shape_cast %10 : vector<8x128xf32> to vector<1x8x128xf32>
    tpu.vector_store %arg4[%c0_5, %c0_6, %c0_7], %13 {strides = array<i32>} : memref<2x8x128xf32, #tpu.memory_space<vmem>>, vector<1x8x128xf32>,
    %14 = vector.extract_strided_slice %0 {offsets = [0, 1], sizes = [8, 1], strides = [1, 1]} : vector<8x2xi32> to vector<8x1xi32>
    %15 = vector.broadcast %14 : vector<8x1xi32> to vector<8x64xi32>
    %16 = arith.cmpi eq, %15, %3 : vector<8x64xi32>
    %17 = arith.extui %16 : vector<8x64xi1> to vector<8x64xi32>
    %18 = arith.sitofp %17 : vector<8x64xi32> to vector<8x64xf32>
    %cst_8 = arith.constant dense<0.000000e+00> : vector<8x128xf32>
    %19 = tpu.matmul %18, %1, %cst_8 {dimension_numbers = #tpu.dot_dimension_numbers<[1], [0], [0], [1], [0, 0, 1, 1], [], []>} : vector<8x64xf32>, vector<64x128xf32>, vector<8x128xf32> -> vector<8x128xf32>
    %20 = arith.addf %19, %2 : vector<8x128xf32>
    %c1 = arith.constant 1 : index
    %c0_9 = arith.constant 0 : index
    %c0_10 = arith.constant 0 : index
    %21 = vector.load %arg4[%c1, %c0_9, %c0_10] : memref<2x8x128xf32, #tpu.memory_space<vmem>>, vector<1x8x128xf32>
    %22 = vector.shape_cast %21 : vector<1x8x128xf32> to vector<8x128xf32>
    %23 = vector.shape_cast %20 : vector<8x128xf32> to vector<1x8x128xf32>
    tpu.vector_store %arg4[%c1, %c0_9, %c0_10], %23 {strides = array<i32>} : memref<2x8x128xf32, #tpu.memory_space<vmem>>, vector<1x8x128xf32>,
    return
  }
  func.func @transform_0(%arg0: i32) -> (i32, i32) {
    %c0_i32 = arith.constant 0 : i32
    %c0_i32_0 = arith.constant 0 : i32
    return %arg0, %c0_i32 : i32, i32
  }
  func.func @transform_1(%arg0: i32) -> (i32, i32) {
    %c0_i32 = arith.constant 0 : i32
    %c0_i32_0 = arith.constant 0 : i32
    %c0_i32_1 = arith.constant 0 : i32
    return %c0_i32, %c0_i32_0 : i32, i32
  }
  func.func @transform_2(%arg0: i32) -> (i32, i32) {
    %c0_i32 = arith.constant 0 : i32
    %c0_i32_0 = arith.constant 0 : i32
    return %arg0, %c0_i32 : i32, i32
  }
  func.func @transform_3(%arg0: i32) -> (i32, i32, i32) {
    %c0_i32 = arith.constant 0 : i32
    %c0_i32_0 = arith.constant 0 : i32
    %c0_i32_1 = arith.constant 0 : i32
    return %c0_i32, %arg0, %c0_i32_0 : i32, i32, i32
  }
}

</mosaic_0001>

<llo_original>
// kernel: tpu_custom_call.1
$region0: #{tpu_custom_call.1}
  #allocation0 [shape = 'u32[]', space=smem, size = 0x4, offset = 0x4, fixed_abs, tag = 'smem constant byte address 0x4 - core index']
  #allocation1 [shape = 'u32[144,128]{1,0:T(1,128)}', space=vmem, size = 0x12000, scoped, tag = 'internal scratch']
  %s0 = inlined_call_operand.vmem [shape: s32[8,2], index: 0, kind: input, shape index: {}]
  %s1 = inlined_call_operand.hbm [shape: f32[64,128], index: 1, kind: input, shape index: {}]
  %s2 = inlined_call_operand.hbm [shape: f32[16,128], index: 2, kind: input, shape index: {}]
  %s3 = inlined_call_operand.hbm [shape: f32[2,8,128], index: 3, kind: output, shape index: {}]
  %s4 = sld [smem:[#allocation0]]
  $region30: #{tpu_custom_call.1} parent=0
    _
  %s6 = ssub.s32 1, %s4
  %s7 = scalar_select 0, %s6, %s4
  $region1: #{tpu_custom_call.1} parent=0
    #allocation2 [shape = 'u8[32768]{0}', space=vmem, size = 0x8000, scoped, tag = 'input window, operand 1, single buffered']
    #allocation3 [shape = 's32[1]{0}', space=sflag, size = 0x4, scoped, tag = 'scoped memory for tpu_custom_call.1']
    #allocation4 [shape = 's32[1]{0}', space=sflag, size = 0x4, scoped, tag = 'scoped memory for tpu_custom_call.1']
    #allocation5 [shape = 'u8[4096]{0}', space=vmem, size = 0x1000, scoped, tag = 'input window, operand 2, single buffered']
    #allocation6 [shape = 's32[1]{0}', space=sflag, size = 0x4, scoped, tag = 'scoped memory for tpu_custom_call.1']
    #allocation7 [shape = 'u8[8192]{0}', space=vmem, size = 0x2000, scoped, tag = 'output window, operand 0, single buffered']
    %8 = vsyncpa [#allocation3], 0
    %9 = vsyncpa [#allocation6], 0
    %10 = vsyncpa [#allocation4], 0
    // Predicated region
    $region2: #{tpu_custom_call.1} parent=1 // pred_check
      _
    $region3: #{tpu_custom_call.1} parent=1 // pred_check_branch
      %12 = sbr.rel (0) target = $region5
    $region4: #{tpu_custom_call.1} parent=1 // pred_region
      _
    $region5: #{tpu_custom_call.1} parent=1 // pred_fallthru
      _
    // Predicated region
    $region6: #{tpu_custom_call.1} parent=1 // pred_check
      _
    $region7: #{tpu_custom_call.1} parent=1 // pred_check_branch
      %14 = sbr.rel (0) target = $region9
    $region8: #{tpu_custom_call.1} parent=1 // pred_region
      %s16 = ssub.s32 1024, 1024
      %17 = vsyncadd [#allocation3], %s16
      %s18 = sshll.u32 [#allocation2], 4
      %s19 = int_to_ptr.vmem [resolvable:$true] %s18
      %24 = dma.hbm_to_vmem [thread:$0]  %s1, 1024, %s19, [#allocation3], 128, 128, 8
    $region9: #{tpu_custom_call.1} parent=1 // pred_fallthru
      _
    // Predicated region
    $region10: #{tpu_custom_call.1} parent=1 // pred_check
      _
    $region11: #{tpu_custom_call.1} parent=1 // pred_check_branch
      %26 = sbr.rel (0) target = $region13
    $region12: #{tpu_custom_call.1} parent=1 // pred_region
      %s28 = ssub.s32 128, 128
      %29 = vsyncadd [#allocation6], %s28
      %s31 = sshll.u32 [#allocation5], 4
      %s32 = int_to_ptr.vmem [resolvable:$true] %s31
      %34 = dma.hbm_to_vmem [thread:$0]  %s2, 128, %s32, [#allocation6]
    $region13: #{tpu_custom_call.1} parent=1 // pred_fallthru
      _
    // Predicated region
    $region14: #{tpu_custom_call.1} parent=1 // pred_check
      _
    $region15: #{tpu_custom_call.1} parent=1 // pred_check_branch
      %36 = sbr.rel (0) target = $region17
    $region16: #{tpu_custom_call.1} parent=1 // pred_region
      %37 = dma.done [#allocation3], 1024
    $region17: #{tpu_custom_call.1} parent=1 // pred_fallthru
      _
    // Predicated region
    $region18: #{tpu_custom_call.1} parent=1 // pred_check
      _
    $region19: #{tpu_custom_call.1} parent=1 // pred_check_branch
      %39 = sbr.rel (0) target = $region21
    $region20: #{tpu_custom_call.1} parent=1 // pred_region
      %40 = dma.done [#allocation6], 128
    $region21: #{tpu_custom_call.1} parent=1 // pred_fallthru
      _
    %v41 = vld [vmem:[%s0] sm:$0xff]
    %v42 = vld [vmem:[#allocation2] sm:$0xff]
    %v43 = vld [vmem:[#allocation2 + $0x8] sm:$0xff]
    %v44 = vld [vmem:[#allocation2 + $0x10] sm:$0xff]
    %v45 = vld [vmem:[#allocation2 + $0x18] sm:$0xff]
    %v46 = vld [vmem:[#allocation2 + $0x20] sm:$0xff]
    %v47 = vld [vmem:[#allocation2 + $0x28] sm:$0xff]
    %v48 = vld [vmem:[#allocation2 + $0x30] sm:$0xff]
    %v49 = vld [vmem:[#allocation2 + $0x38] sm:$0xff]
    %v50 = vld [vmem:[#allocation5] sm:$0xff]
    %v51 = vlaneseq
    %v52 = vand.u32 %v51, 127
    %53 = vset.pattern.permute.xlu0 0
    %54 = vperm.xlu0 %53, %v41
    %v55 = vpop.permute.xlu0 %54
    %vm56 = vcmp.eq.s32.totalorder %v55, %v52
    %v57 = vsel %vm56, 1, 0
    %v58 = vcvt.s32.f32 %v57
    %vm59 = vcmask 523264
    %v61 = vsel %vm59, %v58, 0
    %63 = vmatprep.subr.mxu0 0.0
    %64 = vmatpush1.msra.mxu0 0.0
    %65 = vmatprep.subr.mxu0 0.0
    %66 = vmatpush1.msra.mxu0 0.0
    %67 = vmatprep.subr.mxu0 0.0
    %68 = vmatpush1.msra.mxu0 0.0
    %69 = vmatprep.subr.mxu0 0.0
    %70 = vmatpush1.msra.mxu0 0.0
    %71 = vmatprep.subr.mxu0 0.0
    %72 = vmatpush1.msra.mxu0 0.0
    %73 = vmatprep.subr.mxu0 0.0
    %74 = vmatpush1.msra.mxu0 0.0
    %75 = vmatprep.subr.mxu0 0.0
    %76 = vmatpush1.msra.mxu0 0.0
    %77 = vmatprep.subr.mxu0 0.0
    %78 = vmatpush1.msra.mxu0 0.0
    %79 = vmatprep.subr.mxu0 0.0
    %80 = vmatpush1.msra.mxu0 %v49
    %81 = vmatprep.subr.mxu0 0.0
    %82 = vmatpush1.msra.mxu0 %v48
    %83 = vmatprep.subr.mxu0 0.0
    %84 = vmatpush1.msra.mxu0 %v47
    %85 = vmatprep.subr.mxu0 0.0
    %86 = vmatpush1.msra.mxu0 %v46
    %87 = vmatprep.subr.mxu0 0.0
    %88 = vmatpush1.msra.mxu0 %v45
    %89 = vmatprep.subr.mxu0 0.0
    %90 = vmatpush1.msra.mxu0 %v44
    %91 = vmatprep.subr.mxu0 0.0
    %92 = vmatpush1.msra.mxu0 %v43
    %93 = vmatprep.subr.mxu0 0.0
    %94 = vmatpush1.msra.mxu0 %v42
    %95 = vmatprep.subr.mxu0 0.0
    %96 = vmatpush2.msra.mxu0 0.0
    %97 = vmatprep.subr.mxu0 0.0
    %98 = vmatpush2.msra.mxu0 0.0
    %99 = vmatprep.subr.mxu0 0.0
    %100 = vmatpush2.msra.mxu0 0.0
    %101 = vmatprep.subr.mxu0 0.0
    %102 = vmatpush2.msra.mxu0 0.0
    %103 = vmatprep.subr.mxu0 0.0
    %104 = vmatpush2.msra.mxu0 0.0
    %105 = vmatprep.subr.mxu0 0.0
    %106 = vmatpush2.msra.mxu0 0.0
    %107 = vmatprep.subr.mxu0 0.0
    %108 = vmatpush2.msra.mxu0 0.0
    %109 = vmatprep.subr.mxu0 0.0
    %110 = vmatpush2.msra.mxu0 0.0
    %111 = vmatprep.subr.mxu0 0.0
    %112 = vmatpush2.msra.mxu0 0.0
    %113 = vmatprep.subr.mxu0 0.0
    %114 = vmatpush2.msra.mxu0 0.0
    %115 = vmatprep.subr.mxu0 0.0
    %116 = vmatpush2.msra.mxu0 0.0
    %117 = vmatprep.subr.mxu0 0.0
    %118 = vmatpush2.msra.mxu0 0.0
    %119 = vmatprep.subr.mxu0 0.0
    %120 = vmatpush2.msra.mxu0 0.0
    %121 = vmatprep.subr.mxu0 0.0
    %122 = vmatpush2.msra.mxu0 0.0
    %123 = vmatprep.subr.mxu0 0.0
    %124 = vmatpush2.msra.mxu0 0.0
    %125 = vmatprep.subr.mxu0 0.0
    %126 = vmatpush2.msra.mxu0 0.0
    %127 = vmatprep.mubr.f32.mxu0 0.0
    %128 = vmatmul.mubr.f32.gmra.mxu0 %v61
    %v129 = vpop.f32.mrf.mxu0
    %v130 = vadd.f32 %v50, %v129
    %v131 = vpop.f32.mrf.mxu0
    %132 = vdwg.mxu0
    %133 = vst [vmem:[#allocation7] sm:$0xff] %v130
    %134 = vset.pattern.permute.xlu0 1
    %135 = vperm.xlu0 %134, %v41
    %v136 = vpop.permute.xlu0 %135
    %vm137 = vcmp.eq.s32.totalorder %v136, %v52
    %v138 = vsel %vm137, 1, 0
    %v139 = vcvt.s32.f32 %v138
    %v141 = vsel %vm59, %v139, 0
    %143 = vmatprep.subr.mxu0 0.0
    %144 = vmatpush1.msra.mxu0 0.0
    %145 = vmatprep.subr.mxu0 0.0
    %146 = vmatpush1.msra.mxu0 0.0
    %147 = vmatprep.subr.mxu0 0.0
    %148 = vmatpush1.msra.mxu0 0.0
    %149 = vmatprep.subr.mxu0 0.0
    %150 = vmatpush1.msra.mxu0 0.0
    %151 = vmatprep.subr.mxu0 0.0
    %152 = vmatpush1.msra.mxu0 0.0
    %153 = vmatprep.subr.mxu0 0.0
    %154 = vmatpush1.msra.mxu0 0.0
    %155 = vmatprep.subr.mxu0 0.0
    %156 = vmatpush1.msra.mxu0 0.0
    %157 = vmatprep.subr.mxu0 0.0
    %158 = vmatpush1.msra.mxu0 0.0
    %159 = vmatprep.subr.mxu0 0.0
    %160 = vmatpush1.msra.mxu0 %v49
    %161 = vmatprep.subr.mxu0 0.0
    %162 = vmatpush1.msra.mxu0 %v48
    %163 = vmatprep.subr.mxu0 0.0
    %164 = vmatpush1.msra.mxu0 %v47
    %165 = vmatprep.subr.mxu0 0.0
    %166 = vmatpush1.msra.mxu0 %v46
    %167 = vmatprep.subr.mxu0 0.0
    %168 = vmatpush1.msra.mxu0 %v45
    %169 = vmatprep.subr.mxu0 0.0
    %170 = vmatpush1.msra.mxu0 %v44
    %171 = vmatprep.subr.mxu0 0.0
    %172 = vmatpush1.msra.mxu0 %v43
    %173 = vmatprep.subr.mxu0 0.0
    %174 = vmatpush1.msra.mxu0 %v42
    %175 = vmatprep.subr.mxu0 0.0
    %176 = vmatpush2.msra.mxu0 0.0
    %177 = vmatprep.subr.mxu0 0.0
    %178 = vmatpush2.msra.mxu0 0.0
    %179 = vmatprep.subr.mxu0 0.0
    %180 = vmatpush2.msra.mxu0 0.0
    %181 = vmatprep.subr.mxu0 0.0
    %182 = vmatpush2.msra.mxu0 0.0
    %183 = vmatprep.subr.mxu0 0.0
    %184 = vmatpush2.msra.mxu0 0.0
    %185 = vmatprep.subr.mxu0 0.0
    %186 = vmatpush2.msra.mxu0 0.0
    %187 = vmatprep.subr.mxu0 0.0
    %188 = vmatpush2.msra.mxu0 0.0
    %189 = vmatprep.subr.mxu0 0.0
    %190 = vmatpush2.msra.mxu0 0.0
    %191 = vmatprep.subr.mxu0 0.0
    %192 = vmatpush2.msra.mxu0 0.0
    %193 = vmatprep.subr.mxu0 0.0
    %194 = vmatpush2.msra.mxu0 0.0
    %195 = vmatprep.subr.mxu0 0.0
    %196 = vmatpush2.msra.mxu0 0.0
    %197 = vmatprep.subr.mxu0 0.0
    %198 = vmatpush2.msra.mxu0 0.0
    %199 = vmatprep.subr.mxu0 0.0
    %200 = vmatpush2.msra.mxu0 0.0
    %201 = vmatprep.subr.mxu0 0.0
    %202 = vmatpush2.msra.mxu0 0.0
    %203 = vmatprep.subr.mxu0 0.0
    %204 = vmatpush2.msra.mxu0 0.0
    %205 = vmatprep.subr.mxu0 0.0
    %206 = vmatpush2.msra.mxu0 0.0
    %207 = vmatprep.mubr.f32.mxu0 0.0
    %208 = vmatmul.mubr.f32.gmra.mxu0 %v141
    %v209 = vpop.f32.mrf.mxu0
    %v210 = vadd.f32 %v50, %v209
    %v211 = vpop.f32.mrf.mxu0
    %212 = vdwg.mxu0
    %s213 = scalar_lea.vmem [#allocation7], 8
    %214 = vst [vmem:[%s213] sm:$0xff] %v210
    // Predicated region
    $region22: #{tpu_custom_call.1} parent=1 // pred_check
      _
    $region23: #{tpu_custom_call.1} parent=1 // pred_check_branch
      %216 = sbr.rel (0) target = $region25
    $region24: #{tpu_custom_call.1} parent=1 // pred_region
      %s218 = ssub.s32 256, 256
      %219 = vsyncadd [#allocation4], %s218
      %s220 = sshll.u32 [#allocation7], 4
      %s221 = int_to_ptr.vmem [resolvable:$true] %s220
      %226 = dma.vmem_to_hbm [thread:$0]  %s221, 256, %s3, [#allocation4], 128, 128, 8
    $region25: #{tpu_custom_call.1} parent=1 // pred_fallthru
      _
    // Predicated region
    $region26: #{tpu_custom_call.1} parent=1 // pred_check
      _
    $region27: #{tpu_custom_call.1} parent=1 // pred_check_branch
      %228 = sbr.rel (0) target = $region29
    $region28: #{tpu_custom_call.1} parent=1 // pred_region
      %229 = dma.done [#allocation4], 256
    $region29: #{tpu_custom_call.1} parent=1 // pred_fallthru
      _
    %230 = vsyncpa [#allocation3], 1
    %231 = vsyncpa [#allocation6], 1
    %232 = vsyncpa [#allocation4], 1

</llo_original>
